<compile_context>
chip_gen: v5e
topology: v5e:2x2
jax: 0.10.0
libtpu: 0.0.40
codegen_flags: <defaults>
</compile_context>

<pallas_src>
import jax
import jax.numpy as jnp
from jax.experimental import pallas as pl
from jax.experimental.pallas import tpu as pltpu


def _round_up(x, m):
    return ((x + m - 1) // m) * m


def _default_tile_b():
    # v5e's MXU is 4x128x128 -> 128-row batch tiles; v6e/v7x (2x256x256) prefer 256.
    try:
        kind = jax.devices()[0].device_kind.lower()
        if "v5 lite" in kind or "v5e" in kind or "v5litepod" in kind:
            return 128
    except Exception:
        pass
    return 256


def adaptive_gate_kernel(text_ref, dom_ref,
                         w1_ref, b1_ref,
                         w2_ref, b2_ref,
                         wgt_ref, wgd_ref, bg_ref,
                         out_ref):
    # linear_1 + relu  (MXU bf16 x bf16 -> f32 accumulate; bias/ReLU in f32 on the VPU)
    t = jnp.dot(text_ref[...], w1_ref[...], preferred_element_type=jnp.float32)
    t = jnp.maximum(t + b1_ref[...], 0.0)

    # linear_2 + relu
    d = jnp.dot(dom_ref[...], w2_ref[...], preferred_element_type=jnp.float32)
    d = jnp.maximum(d + b2_ref[...], 0.0)

    # TODO(synk): nn.Dropout is treated as identity (eval / inference mode).

    # gate_linear(concat([t, d], -1)) == <t, wg_t> + <d, wg_d> + bg.
    # VPU multiply + XLU lane reduction: keeps the MXU free of N=1 matmuls.
    logits = (jnp.sum(t * wgt_ref[...], axis=-1, keepdims=True)
              + jnp.sum(d * wgd_ref[...], axis=-1, keepdims=True)
              + bg_ref[0, 0])

    out_ref[...] = jax.nn.sigmoid(logits).astype(out_ref.dtype)


def adaptive_gate(text_feature, domain_feature, params, *, tile_b=None):
    """text_feature, domain_feature: [B, d_model] -> gate [B, 1] (float32)."""
    B, d_model = text_feature.shape

    if tile_b is None:
        tile_b = _default_tile_b()
    tile_b = max(8, _round_up(min(tile_b, _round_up(B, 8)), 8))
    b_pad = _round_up(B, tile_b)
    num_tiles = b_pad // tile_b

    compute_dtype = jnp.bfloat16  # matmul operands only; elementwise math stays f32

    # Pre-transposed (in, out) weights, cast to bf16; small vectors kept f32.
    w1 = params["w1"].astype(compute_dtype)
    w2 = params["w2"].astype(compute_dtype)
    b1 = params["b1"].reshape(1, d_model).astype(jnp.float32)
    b2 = params["b2"].reshape(1, d_model).astype(jnp.float32)
    wg = params["wg"].astype(jnp.float32)
    wg_t = wg[:d_model, 0].reshape(1, d_model)    # text half as a lane row
    wg_d = wg[d_model:, 0].reshape(1, d_model)    # domain half as a lane row
    bg = params["bg"].reshape(1, 1).astype(jnp.float32)

    tf = text_feature.astype(compute_dtype)
    df = domain_feature.astype(compute_dtype)
    if b_pad != B:
        tf = jnp.pad(tf, ((0, b_pad - B), (0, 0)))
        df = jnp.pad(df, ((0, b_pad - B), (0, 0)))

    act_spec = pl.BlockSpec((tile_b, d_model), lambda i: (i, 0))
    w_spec = pl.BlockSpec((d_model, d_model), lambda i: (0, 0))   # resident across batch tiles
    row_spec = pl.BlockSpec((1, d_model), lambda i: (0, 0))
    smem_spec = pl.BlockSpec(memory_space=pltpu.MemorySpace.SMEM)  # bg scalar, no VMEM tile
    out_spec = pl.BlockSpec((tile_b, 1), lambda i: (i, 0))

    # Resident VMEM footprint: weights (count x2 for buffering), double-buffered activation
    # tiles, sublane-padded bias / gate rows, and the output column.
    vmem_bytes = (2 * (2 * d_model * d_model * 2)          # W1, W2 (bf16)
                  + 2 * (2 * tile_b * d_model * 2)         # text/dom tiles (bf16), double-buffered
                  + 4 * (8 * max(d_model, 128) * 4)        # b1, b2, wg_t, wg_d (f32, padded)
                  + 2 * (tile_b * 128 * 4))                # out column (f32, lane-padded)
    vmem_limit = int(min(max(2 * vmem_bytes, 32 * 1024 * 1024), 64 * 1024 * 1024))
    # TODO(synk): if the two d_model x d_model bf16 weights no longer fit VMEM (d_model >~ 2.8K on
    # v7x's 64 MiB), add a grid axis tiling the weights' output dim; not needed at these sizes.

    out = pl.pallas_call(
        adaptive_gate_kernel,
        grid=(num_tiles,),
        in_specs=[act_spec, act_spec,
                  w_spec, row_spec,
                  w_spec, row_spec,
                  row_spec, row_spec, smem_spec],
        out_specs=out_spec,
        out_shape=jax.ShapeDtypeStruct((b_pad, 1), jnp.float32),
        compiler_params=pltpu.CompilerParams(
            dimension_semantics=("parallel",),   # batch tiles independent (v7x: 2 TensorCores)
            vmem_limit_bytes=vmem_limit,
        ),
    )(tf, df, w1, b1, w2, b2, wg_t, wg_d, bg)

    return out[:B]


def init_params(key, d_model):
    """Deterministic synthetic parameters with nn.Linear-like shapes (f32 masters)."""
    k1, k2, k3, k4, k5, k6 = jax.random.split(key, 6)
    scale = 1.0 / jnp.sqrt(d_model)
    return {
        # stored pre-transposed: (in_features, out_features)
        "w1": jax.random.uniform(k1, (d_model, d_model), jnp.float32, -scale, scale),
        "b1": jax.random.uniform(k2, (d_model,), jnp.float32, -scale, scale),
        "w2": jax.random.uniform(k3, (d_model, d_model), jnp.float32, -scale, scale),
        "b2": jax.random.uniform(k4, (d_model,), jnp.float32, -scale, scale),
        "wg": jax.random.uniform(k5, (2 * d_model, 1), jnp.float32, -scale, scale),
        "bg": jax.random.uniform(k6, (1,), jnp.float32, -scale, scale),
    }


def _reference(text, dom, params):
    """Pure-JAX reference matching kernel numerics: bf16-rounded matmul operands, f32 math."""
    hi = jax.lax.Precision.HIGHEST
    f32 = jnp.float32
    w1 = params["w1"].astype(jnp.bfloat16).astype(f32)
    w2 = params["w2"].astype(jnp.bfloat16).astype(f32)
    tb = text.astype(jnp.bfloat16).astype(f32)
    db = dom.astype(jnp.bfloat16).astype(f32)
    t = jnp.maximum(jnp.dot(tb, w1, precision=hi) + params["b1"], 0.0)
    d = jnp.maximum(jnp.dot(db, w2, precision=hi) + params["b2"], 0.0)
    logits = jnp.dot(jnp.concatenate([t, d], axis=1), params["wg"], precision=hi) + params["bg"]
    return jax.nn.sigmoid(logits)


if __name__ == "__main__":
    key = jax.random.PRNGKey(0)
    k_p1, k_t1, k_d1, k_p2, k_t2, k_d2 = jax.random.split(key, 6)

    # Case 1: small shapes implied by the module (B=2, d_model=32), single batch tile.
    B, d_model = 2, 32
    params = init_params(k_p1, d_model)
    text = jax.random.normal(k_t1, (B, d_model), jnp.float32)
    dom = jax.random.normal(k_d1, (B, d_model), jnp.float32)
    gate = jax.block_until_ready(adaptive_gate(text, dom, params))
    ref = _reference(text, dom, params)
    assert gate.shape == (B, 1)
    assert jnp.allclose(gate, ref, atol=1e-3), (gate, ref)

    # Case 2: non-multiple batch exercising the batch grid + padding (tile_b forced small).
    B2, d2 = 20, 128
    params2 = init_params(k_p2, d2)
    text2 = jax.random.normal(k_t2, (B2, d2), jnp.float32)
    dom2 = jax.random.normal(k_d2, (B2, d2), jnp.float32)
    gate2 = jax.block_until_ready(adaptive_gate(text2, dom2, params2, tile_b=8))
    ref2 = _reference(text2, dom2, params2)
    assert gate2.shape == (B2, 1)
    assert jnp.allclose(gate2, ref2, atol=1e-3), (gate2, ref2)

    print("KERNEL_OK")
</pallas_src>

<mosaic_0001>
module attributes {stable_mosaic.version = 11 : i64} {
  func.func @adaptive_gate_kernel(%arg0: i32, %arg1: memref<8x32xbf16, #tpu.memory_space<vmem>>, %arg2: memref<8x32xbf16, #tpu.memory_space<vmem>>, %arg3: memref<32x32xbf16, #tpu.memory_space<vmem>>, %arg4: memref<1x32xf32, #tpu.memory_space<vmem>>, %arg5: memref<32x32xbf16, #tpu.memory_space<vmem>>, %arg6: memref<1x32xf32, #tpu.memory_space<vmem>>, %arg7: memref<1x32xf32, #tpu.memory_space<vmem>>, %arg8: memref<1x32xf32, #tpu.memory_space<vmem>>, %arg9: memref<1x1xf32, #tpu.memory_space<smem>>, %arg10: memref<8x1xf32, #tpu.memory_space<vmem>>) attributes {dimension_semantics = [#tpu.dimension_semantics<parallel>], iteration_bounds = array<i64: 1>, scalar_prefetch = 0 : i64, scratch_operands = 0 : i64, tpu.core_type = #tpu.core_type<tc>, window_params = [{transform_indices = @transform_0, window_bounds = array<i64: 8, 32>}, {transform_indices = @transform_1, window_bounds = array<i64: 8, 32>}, {pipeline_mode = #tpu.pipeline_mode<synchronous>, transform_indices = @transform_2, window_bounds = array<i64: 32, 32>}, {pipeline_mode = #tpu.pipeline_mode<synchronous>, transform_indices = @transform_3, window_bounds = array<i64: 1, 32>}, {pipeline_mode = #tpu.pipeline_mode<synchronous>, transform_indices = @transform_4, window_bounds = array<i64: 32, 32>}, {pipeline_mode = #tpu.pipeline_mode<synchronous>, transform_indices = @transform_5, window_bounds = array<i64: 1, 32>}, {pipeline_mode = #tpu.pipeline_mode<synchronous>, transform_indices = @transform_6, window_bounds = array<i64: 1, 32>}, {pipeline_mode = #tpu.pipeline_mode<synchronous>, transform_indices = @transform_7, window_bounds = array<i64: 1, 32>}, {transform_indices = @transform_8, window_bounds = array<i64: 1, 1>}, {transform_indices = @transform_9, window_bounds = array<i64: 8, 1>}]} {
    %c0 = arith.constant 0 : index
    %c0_0 = arith.constant 0 : index
    %0 = vector.load %arg1[%c0, %c0_0] : memref<8x32xbf16, #tpu.memory_space<vmem>>, vector<8x32xbf16>
    %c0_1 = arith.constant 0 : index
    %c0_2 = arith.constant 0 : index
    %1 = vector.load %arg3[%c0_1, %c0_2] : memref<32x32xbf16, #tpu.memory_space<vmem>>, vector<32x32xbf16>
    %cst = arith.constant dense<0.000000e+00> : vector<8x32xf32>
    %2 = tpu.matmul %0, %1, %cst {dimension_numbers = #tpu.dot_dimension_numbers<[1], [0], [0], [1], [0, 0, 1, 1], [], []>} : vector<8x32xbf16>, vector<32x32xbf16>, vector<8x32xf32> -> vector<8x32xf32>
    %c0_3 = arith.constant 0 : index
    %c0_4 = arith.constant 0 : index
    %3 = vector.load %arg4[%c0_3, %c0_4] : memref<1x32xf32, #tpu.memory_space<vmem>>, vector<1x32xf32>
    %4 = vector.broadcast %3 : vector<1x32xf32> to vector<8x32xf32>
    %5 = arith.addf %2, %4 : vector<8x32xf32>
    %cst_5 = arith.constant 0.000000e+00 : f32
    %6 = vector.broadcast %cst_5 : f32 to vector<8x32xf32>
    %7 = arith.maximumf %5, %6 : vector<8x32xf32>
    %c0_6 = arith.constant 0 : index
    %c0_7 = arith.constant 0 : index
    %8 = vector.load %arg2[%c0_6, %c0_7] : memref<8x32xbf16, #tpu.memory_space<vmem>>, vector<8x32xbf16>
    %c0_8 = arith.constant 0 : index
    %c0_9 = arith.constant 0 : index
    %9 = vector.load %arg5[%c0_8, %c0_9] : memref<32x32xbf16, #tpu.memory_space<vmem>>, vector<32x32xbf16>
    %cst_10 = arith.constant dense<0.000000e+00> : vector<8x32xf32>
    %10 = tpu.matmul %8, %9, %cst_10 {dimension_numbers = #tpu.dot_dimension_numbers<[1], [0], [0], [1], [0, 0, 1, 1], [], []>} : vector<8x32xbf16>, vector<32x32xbf16>, vector<8x32xf32> -> vector<8x32xf32>
    %c0_11 = arith.constant 0 : index
    %c0_12 = arith.constant 0 : index
    %11 = vector.load %arg6[%c0_11, %c0_12] : memref<1x32xf32, #tpu.memory_space<vmem>>, vector<1x32xf32>
    %12 = vector.broadcast %11 : vector<1x32xf32> to vector<8x32xf32>
    %13 = arith.addf %10, %12 : vector<8x32xf32>
    %cst_13 = arith.constant 0.000000e+00 : f32
    %14 = vector.broadcast %cst_13 : f32 to vector<8x32xf32>
    %15 = arith.maximumf %13, %14 : vector<8x32xf32>
    %c0_14 = arith.constant 0 : index
    %c0_15 = arith.constant 0 : index
    %16 = vector.load %arg7[%c0_14, %c0_15] : memref<1x32xf32, #tpu.memory_space<vmem>>, vector<1x32xf32>
    %17 = vector.broadcast %16 : vector<1x32xf32> to vector<8x32xf32>
    %18 = arith.mulf %7, %17 : vector<8x32xf32>
    %cst_16 = arith.constant dense<0.000000e+00> : vector<8xf32>
    %19 = vector.multi_reduction <add>, %18, %cst_16 [1] : vector<8x32xf32> to vector<8xf32>
    %20 = vector.shape_cast %19 : vector<8xf32> to vector<8x1xf32>
    %c0_17 = arith.constant 0 : index
    %c0_18 = arith.constant 0 : index
    %21 = vector.load %arg8[%c0_17, %c0_18] : memref<1x32xf32, #tpu.memory_space<vmem>>, vector<1x32xf32>
    %22 = vector.broadcast %21 : vector<1x32xf32> to vector<8x32xf32>
    %23 = arith.mulf %15, %22 : vector<8x32xf32>
    %cst_19 = arith.constant dense<0.000000e+00> : vector<8xf32>
    %24 = vector.multi_reduction <add>, %23, %cst_19 [1] : vector<8x32xf32> to vector<8xf32>
    %25 = vector.shape_cast %24 : vector<8xf32> to vector<8x1xf32>
    %26 = arith.addf %20, %25 : vector<8x1xf32>
    %c0_20 = arith.constant 0 : index
    %c0_21 = arith.constant 0 : index
    %27 = memref.load %arg9[%c0_20, %c0_21] : memref<1x1xf32, #tpu.memory_space<smem>>
    %28 = vector.broadcast %27 : f32 to vector<8x1xf32>
    %29 = arith.addf %26, %28 : vector<8x1xf32>
    %30 = arith.negf %29 : vector<8x1xf32>
    %31 = math.exp %30 : vector<8x1xf32>
    %cst_22 = arith.constant 1.000000e+00 : f32
    %32 = vector.broadcast %cst_22 : f32 to vector<8x1xf32>
    %33 = arith.addf %32, %31 : vector<8x1xf32>
    %34 = arith.divf %32, %33 : vector<8x1xf32>
    %c0_23 = arith.constant 0 : index
    %c0_24 = arith.constant 0 : index
    %35 = vector.load %arg10[%c0_23, %c0_24] : memref<8x1xf32, #tpu.memory_space<vmem>>, vector<8x1xf32>
    tpu.vector_store %arg10[%c0_23, %c0_24], %34 {strides = array<i32>} : memref<8x1xf32, #tpu.memory_space<vmem>>, vector<8x1xf32>,
    return
  }
  func.func @transform_0(%arg0: i32) -> (i32, i32) {
    %c0_i32 = arith.constant 0 : i32
    %c0_i32_0 = arith.constant 0 : i32
    return %arg0, %c0_i32 : i32, i32
  }
  func.func @transform_1(%arg0: i32) -> (i32, i32) {
    %c0_i32 = arith.constant 0 : i32
    %c0_i32_0 = arith.constant 0 : i32
    return %arg0, %c0_i32 : i32, i32
  }
  func.func @transform_2(%arg0: i32) -> (i32, i32) {
    %c0_i32 = arith.constant 0 : i32
    %c0_i32_0 = arith.constant 0 : i32
    %c0_i32_1 = arith.constant 0 : i32
    return %c0_i32, %c0_i32_0 : i32, i32
  }
  func.func @transform_3(%arg0: i32) -> (i32, i32) {
    %c0_i32 = arith.constant 0 : i32
    %c0_i32_0 = arith.constant 0 : i32
    %c0_i32_1 = arith.constant 0 : i32
    return %c0_i32, %c0_i32_0 : i32, i32
  }
  func.func @transform_4(%arg0: i32) -> (i32, i32) {
    %c0_i32 = arith.constant 0 : i32
    %c0_i32_0 = arith.constant 0 : i32
    %c0_i32_1 = arith.constant 0 : i32
    return %c0_i32, %c0_i32_0 : i32, i32
  }
  func.func @transform_5(%arg0: i32) -> (i32, i32) {
    %c0_i32 = arith.constant 0 : i32
    %c0_i32_0 = arith.constant 0 : i32
    %c0_i32_1 = arith.constant 0 : i32
    return %c0_i32, %c0_i32_0 : i32, i32
  }
  func.func @transform_6(%arg0: i32) -> (i32, i32) {
    %c0_i32 = arith.constant 0 : i32
    %c0_i32_0 = arith.constant 0 : i32
    %c0_i32_1 = arith.constant 0 : i32
    return %c0_i32, %c0_i32_0 : i32, i32
  }
  func.func @transform_7(%arg0: i32) -> (i32, i32) {
    %c0_i32 = arith.constant 0 : i32
    %c0_i32_0 = arith.constant 0 : i32
    %c0_i32_1 = arith.constant 0 : i32
    return %c0_i32, %c0_i32_0 : i32, i32
  }
  func.func @transform_8(%arg0: i32) -> (i32, i32) {
    %c0_i32 = arith.constant 0 : i32
    %c0_i32_0 = arith.constant 0 : i32
    %c0_i32_1 = arith.constant 0 : i32
    return %c0_i32, %c0_i32_0 : i32, i32
  }
  func.func @transform_9(%arg0: i32) -> (i32, i32) {
    %c0_i32 = arith.constant 0 : i32
    %c0_i32_0 = arith.constant 0 : i32
    return %arg0, %c0_i32 : i32, i32
  }
}

</mosaic_0001>

<llo_original>
// kernel: tpu_custom_call.1
$region0: #{tpu_custom_call.1}
  #allocation0 [shape = 'u32[]', space=smem, size = 0x4, offset = 0x4, fixed_abs, tag = 'smem constant byte address 0x4 - core index']
  #allocation1 [shape = 'u32[72,128]{1,0:T(1,128)}', space=vmem, size = 0x9000, scoped, tag = 'internal scratch']
  #allocation2 [shape = 'f32[1,1]{1,0:T(1,128)S(6)}', space=smem, size = 0x200, scoped, tag = 'scoped memory for tpu_custom_call.1']
  %s0 = inlined_call_operand.hbm [shape: bf16[8,32], index: 0, kind: input, shape index: {}]
  %s1 = inlined_call_operand.hbm [shape: bf16[8,32], index: 1, kind: input, shape index: {}]
  %s2 = inlined_call_operand.hbm [shape: bf16[32,32], index: 2, kind: input, shape index: {}]
  %s3 = inlined_call_operand.vmem [shape: f32[1,32], index: 3, kind: input, shape index: {}]
  %s4 = inlined_call_operand.hbm [shape: bf16[32,32], index: 4, kind: input, shape index: {}]
  %s5 = inlined_call_operand.vmem [shape: f32[1,32], index: 5, kind: input, shape index: {}]
  %s6 = inlined_call_operand.vmem [shape: f32[1,32], index: 6, kind: input, shape index: {}]
  %s7 = inlined_call_operand.vmem [shape: f32[1,32], index: 7, kind: input, shape index: {}]
  %s8 = inlined_call_operand.<no memory space> [shape: f32[1,1], index: 8, kind: input, shape index: {}]
  %s9 = inlined_call_operand.vmem [shape: f32[8,1], index: 9, kind: output, shape index: {}]
  %s10 = sld [smem:[#allocation0]]
  $region62: #{tpu_custom_call.1} parent=0
    _
  %s12 = ssub.s32 1, %s10
  %s13 = scalar_select 0, %s12, %s10
  %14 = sst [smem:[#allocation2]] %s8
  $region1: #{tpu_custom_call.1} parent=0
    #allocation3 [shape = 'u8[2048]{0}', space=vmem, size = 0x800, scoped, tag = 'input window, operand 0, single buffered']
    #allocation4 [shape = 's32[1]{0}', space=sflag, size = 0x4, scoped, tag = 'scoped memory for tpu_custom_call.1']
    #allocation5 [shape = 'u8[2048]{0}', space=vmem, size = 0x800, scoped, tag = 'input window, operand 1, single buffered']
    #allocation6 [shape = 's32[1]{0}', space=sflag, size = 0x4, scoped, tag = 'scoped memory for tpu_custom_call.1']
    #allocation7 [shape = 'u8[8192]{0}', space=vmem, size = 0x2000, scoped, tag = 'input window, operand 2, single buffered']
    #allocation8 [shape = 'u8[8192]{0}', space=vmem, size = 0x2000, scoped, tag = 'input window, operand 4, single buffered']
    #allocation9 [shape = 's32[1]{0}', space=sflag, size = 0x4, scoped, tag = 'scoped memory for tpu_custom_call.1']
    %15 = vsyncpa [#allocation4], 0
    %16 = vsyncpa [#allocation6], 0
    %17 = vsyncpa [#allocation9], 0
    // Predicated region
    $region2: #{tpu_custom_call.1} parent=1 // pred_check
      _
    $region3: #{tpu_custom_call.1} parent=1 // pred_check_branch
      %19 = sbr.rel (0) target = $region5
    $region4: #{tpu_custom_call.1} parent=1 // pred_region
      %21 = vsyncadd [#allocation4], 0
      %s23 = sshll.u32 %s0, 4
      %s24 = int_to_ptr.hbm [resolvable:$true] %s23
      %s25 = sshll.u32 [#allocation3], 4
      %s26 = int_to_ptr.vmem [resolvable:$true] %s25
      %28 = dma.hbm_to_vmem [thread:$0]  %s24, 64, %s26, [#allocation4]
    $region5: #{tpu_custom_call.1} parent=1 // pred_fallthru
      _
    // Predicated region
    $region6: #{tpu_custom_call.1} parent=1 // pred_check
      _
    $region7: #{tpu_custom_call.1} parent=1 // pred_check_branch
      %30 = sbr.rel (0) target = $region9
    $region8: #{tpu_custom_call.1} parent=1 // pred_region
      %32 = vsyncadd [#allocation6], 0
      %s34 = sshll.u32 %s1, 4
      %s35 = int_to_ptr.hbm [resolvable:$true] %s34
      %s36 = sshll.u32 [#allocation5], 4
      %s37 = int_to_ptr.vmem [resolvable:$true] %s36
      %39 = dma.hbm_to_vmem [thread:$0]  %s35, 64, %s37, [#allocation6]
    $region9: #{tpu_custom_call.1} parent=1 // pred_fallthru
      _
    // Predicated region
    $region10: #{tpu_custom_call.1} parent=1 // pred_check
      _
    $region11: #{tpu_custom_call.1} parent=1 // pred_check_branch
      %41 = sbr.rel (0) target = $region13
    $region12: #{tpu_custom_call.1} parent=1 // pred_region
      %43 = vsyncadd [#allocation6], 0
      %s44 = sshll.u32 %s2, 4
      %s45 = int_to_ptr.hbm [resolvable:$true] %s44
      %s46 = sshll.u32 [#allocation7], 4
      %s47 = int_to_ptr.vmem [resolvable:$true] %s46
      %52 = dma.hbm_to_vmem [thread:$0]  %s45, 256, %s47, [#allocation6], 64, 64, 4
    $region13: #{tpu_custom_call.1} parent=1 // pred_fallthru
      _
    // Predicated region
    $region14: #{tpu_custom_call.1} parent=1 // pred_check
      _
    $region15: #{tpu_custom_call.1} parent=1 // pred_check_branch
      %54 = sbr.rel (0) target = $region17
    $region16: #{tpu_custom_call.1} parent=1 // pred_region
      _
    $region17: #{tpu_custom_call.1} parent=1 // pred_fallthru
      _
    // Predicated region
    $region18: #{tpu_custom_call.1} parent=1 // pred_check
      _
    $region19: #{tpu_custom_call.1} parent=1 // pred_check_branch
      %56 = sbr.rel (0) target = $region21
    $region20: #{tpu_custom_call.1} parent=1 // pred_region
      %58 = vsyncadd [#allocation9], 0
      %s59 = sshll.u32 %s4, 4
      %s60 = int_to_ptr.hbm [resolvable:$true] %s59
      %s61 = sshll.u32 [#allocation8], 4
      %s62 = int_to_ptr.vmem [resolvable:$true] %s61
      %67 = dma.hbm_to_vmem [thread:$0]  %s60, 256, %s62, [#allocation9], 64, 64, 4
    $region21: #{tpu_custom_call.1} parent=1 // pred_fallthru
      _
    // Predicated region
    $region22: #{tpu_custom_call.1} parent=1 // pred_check
      _
    $region23: #{tpu_custom_call.1} parent=1 // pred_check_branch
      %69 = sbr.rel (0) target = $region25
    $region24: #{tpu_custom_call.1} parent=1 // pred_region
      _
    $region25: #{tpu_custom_call.1} parent=1 // pred_fallthru
      _
    // Predicated region
    $region26: #{tpu_custom_call.1} parent=1 // pred_check
      _
    $region27: #{tpu_custom_call.1} parent=1 // pred_check_branch
      %71 = sbr.rel (0) target = $region29
    $region28: #{tpu_custom_call.1} parent=1 // pred_region
      _
    $region29: #{tpu_custom_call.1} parent=1 // pred_fallthru
      _
    // Predicated region
    $region30: #{tpu_custom_call.1} parent=1 // pred_check
      _
    $region31: #{tpu_custom_call.1} parent=1 // pred_check_branch
      %73 = sbr.rel (0) target = $region33
    $region32: #{tpu_custom_call.1} parent=1 // pred_region
      _
    $region33: #{tpu_custom_call.1} parent=1 // pred_fallthru
      _
    // Predicated region
    $region34: #{tpu_custom_call.1} parent=1 // pred_check
      _
    $region35: #{tpu_custom_call.1} parent=1 // pred_check_branch
      %75 = sbr.rel (0) target = $region37
    $region36: #{tpu_custom_call.1} parent=1 // pred_region
      _
    $region37: #{tpu_custom_call.1} parent=1 // pred_fallthru
      _
    // Predicated region
    $region38: #{tpu_custom_call.1} parent=1 // pred_check
      _
    $region39: #{tpu_custom_call.1} parent=1 // pred_check_branch
      %77 = sbr.rel (0) target = $region41
    $region40: #{tpu_custom_call.1} parent=1 // pred_region
      %79 = dma.done [#allocation4], 64
    $region41: #{tpu_custom_call.1} parent=1 // pred_fallthru
      _
    // Predicated region
    $region42: #{tpu_custom_call.1} parent=1 // pred_check
      _
    $region43: #{tpu_custom_call.1} parent=1 // pred_check_branch
      %81 = sbr.rel (0) target = $region45
    $region44: #{tpu_custom_call.1} parent=1 // pred_region
      %83 = dma.done [#allocation6], 64
    $region45: #{tpu_custom_call.1} parent=1 // pred_fallthru
      _
    // Predicated region
    $region46: #{tpu_custom_call.1} parent=1 // pred_check
      _
    $region47: #{tpu_custom_call.1} parent=1 // pred_check_branch
      %85 = sbr.rel (0) target = $region49
    $region48: #{tpu_custom_call.1} parent=1 // pred_region
      %87 = dma.done [#allocation6], 256
    $region49: #{tpu_custom_call.1} parent=1 // pred_fallthru
      _
    // Predicated region
    $region50: #{tpu_custom_call.1} parent=1 // pred_check
      _
    $region51: #{tpu_custom_call.1} parent=1 // pred_check_branch
      %89 = sbr.rel (0) target = $region53
    $region52: #{tpu_custom_call.1} parent=1 // pred_region
      %91 = dma.done [#allocation9], 256
    $region53: #{tpu_custom_call.1} parent=1 // pred_fallthru
      _
    %v93 = vld [vmem:[#allocation3] sm:$0xf]
    %v94 = vld [vmem:[#allocation7] sm:$0xf]
    %v95 = vld [vmem:[#allocation7 + $0x4] sm:$0xf]
    %v96 = vld [vmem:[#allocation7 + $0x8] sm:$0xf]
    %v97 = vld [vmem:[#allocation7 + $0xc] sm:$0xf]
    %v98 = vld [vmem:[%s3] sm:$0x1]
    %v100 = vperm.slane %v98, 0
    %v106 = vunpack.c.l.b16 %v94
    %v107 = vunpack.c.l.b16 %v95
    %v108 = vunpack.c.l.b16 %v96
    %v109 = vunpack.c.l.b16 %v97
    %v110 = vpack.c.b16 %v107, %v106
    %v111 = vpack.c.b16 %v109, %v108
    %vm114 = vcmask 261120
    %v116 = vsel %vm114, %v93, 0
    %118 = vmatpush.bf16.msra.mxu0 0
    %119 = vmatpush.bf16.msra.mxu0 0
    %120 = vmatpush.bf16.msra.mxu0 0
    %121 = vmatpush.bf16.msra.mxu0 0
    %122 = vmatpush.bf16.msra.mxu0 0
    %123 = vmatpush.bf16.msra.mxu0 0
    %124 = vmatpush.bf16.msra.mxu0 %v111
    %125 = vmatpush.bf16.msra.mxu0 %v110
    %126 = vmatmul.bf16.gmra.mxu0 %v116
    %v127 = vpop.f32.mrf.mxu0
    %v128 = vadd.f32 %v100, %v127
    %v129 = vpop.f32.mrf.mxu0
    %130 = vdwg.mxu0
    %v131 = vmax.f32 %v128, 0.0
    %v132 = vld [vmem:[#allocation5] sm:$0xf]
    %v133 = vld [vmem:[#allocation8] sm:$0xf]
    %v134 = vld [vmem:[#allocation8 + $0x4] sm:$0xf]
    %v135 = vld [vmem:[#allocation8 + $0x8] sm:$0xf]
    %v136 = vld [vmem:[#allocation8 + $0xc] sm:$0xf]
    %v137 = vld [vmem:[%s5] sm:$0x1]
    %v139 = vperm.slane %v137, 0
    %v145 = vunpack.c.l.b16 %v133
    %v146 = vunpack.c.l.b16 %v134
    %v147 = vunpack.c.l.b16 %v135
    %v148 = vunpack.c.l.b16 %v136
    %v149 = vpack.c.b16 %v146, %v145
    %v150 = vpack.c.b16 %v148, %v147
    %v154 = vsel %vm114, %v132, 0
    %156 = vmatpush.bf16.msra.mxu0 0
    %157 = vmatpush.bf16.msra.mxu0 0
    %158 = vmatpush.bf16.msra.mxu0 0
    %159 = vmatpush.bf16.msra.mxu0 0
    %160 = vmatpush.bf16.msra.mxu0 0
    %161 = vmatpush.bf16.msra.mxu0 0
    %162 = vmatpush.bf16.msra.mxu0 %v150
    %163 = vmatpush.bf16.msra.mxu0 %v149
    %164 = vmatmul.bf16.gmra.mxu0 %v154
    %v165 = vpop.f32.mrf.mxu0
    %v166 = vadd.f32 %v139, %v165
    %v167 = vpop.f32.mrf.mxu0
    %168 = vdwg.mxu0
    %v169 = vmax.f32 %v166, 0.0
    %v170 = vld [vmem:[%s6] sm:$0x1]
    %v172 = vperm.slane %v170, 0
    %v174 = vmul.f32 %v131, %v172
    %v175 = vsel %vm114, %v174, 0.0
    %176 = vadd.xlane.f32.xlu0 %v175
    %v177 = vpop.xlane.xlu0 %176
    %v178 = vld [vmem:[%s7] sm:$0x1]
    %v180 = vperm.slane %v178, 0
    %v182 = vmul.f32 %v169, %v180
    %v183 = vsel %vm114, %v182, 0.0
    %184 = vadd.xlane.f32.xlu0 %v183
    %v185 = vpop.xlane.xlu0 %184
    %v186 = vadd.f32 %v177, %v185
    %s187 = sld [smem:[#allocation2]]
    %v188 = vstv %s187
    %v189 = vadd.f32 %v186, %v188
    %v190 = vxor.u32 %v189, 2147483648
    %v191 = vmul.f32 %v190, 1.442695
    %v192 = vpow.pop %v191
    %v193 = vadd.f32 %v192, 1.0
    %v194 = vrcp.pop %v193
    %v195 = vmul.f32 %v193, %v194
    %v196 = vsub.f32 1.0, %v195
    %v197 = vmul.f32 %v194, %v196
    %v198 = vadd.f32 %v194, %v197
    %vm199 = vweird.f32 %v193
    %vm200 = vweird.f32 %v194
    %vm201 = vmor %vm199, %vm200
    %v202 = vsel %vm201, %v194, %v198
    %v203 = vand.u32 2147483647, %v193
    %vm204 = vcmp.eq.f32.partialorder %v203, 8.507059e+37
    %v205 = vand.u32 %v193, 2147483648
    %v206 = vor.u32 1.1754944e-38, %v205
    %v207 = vsel %vm204, %v206, %v202
    %v208 = vmul.f32 1.0, %v207
    %vm209 = vcmask 7168
    %210 = vst.msk [vmem:[%s9] sm:$0xff] %vm209, %v208
    // Predicated region
    $region54: #{tpu_custom_call.1} parent=1 // pred_check
      _
    $region55: #{tpu_custom_call.1} parent=1 // pred_check_branch
      %212 = sbr.rel (0) target = $region57
    $region56: #{tpu_custom_call.1} parent=1 // pred_region
      _
    $region57: #{tpu_custom_call.1} parent=1 // pred_fallthru
      _
    // Predicated region
    $region58: #{tpu_custom_call.1} parent=1 // pred_check
      _
    $region59: #{tpu_custom_call.1} parent=1 // pred_check_branch
      %214 = sbr.rel (0) target = $region61
    $region60: #{tpu_custom_call.1} parent=1 // pred_region
      _
    $region61: #{tpu_custom_call.1} parent=1 // pred_fallthru
      _
    %215 = vsyncpa [#allocation4], 1
    %216 = vsyncpa [#allocation6], 1
    %217 = vsyncpa [#allocation9], 1

</llo_original>
